<compile_context>
chip_gen: v6e
topology: v6e:2x2x1
jax: 0.10.0
libtpu: 0.0.40
codegen_flags: <defaults>
</compile_context>

<pallas_src>
import functools

import numpy as np

import jax
import jax.numpy as jnp
from jax.experimental import pallas as pl
from jax.experimental.pallas import tpu as pltpu


def _round_up(x, m):
    return (x + m - 1) // m * m


def _make_tap_masks(H, W):
    """Host-side constant: (9, 1, H*W) f32 validity masks for zero padding=1."""
    h = np.arange(H)[:, None]
    w = np.arange(W)[None, :]
    masks = []
    for kh in range(3):
        for kw in range(3):
            dh, dw = kh - 1, kw - 1
            valid = ((h + dh >= 0) & (h + dh < H) &
                     (w + dw >= 0) & (w + dw < W))
            masks.append(valid.reshape(-1).astype(np.float32))
    return np.stack(masks, axis=0)[:, None, :]


def _convx2_kernel(mask_ref, x_ref, w1_ref, b1_ref, w2_ref, b2_ref, o_ref, *, W):
    """Fused conv3x3+bias+ReLU -> conv3x3+bias+ReLU; one batch element per grid step.

    mask_ref: (9, 1, HW)        border-validity masks (shared by both convs)
    x_ref   : (1, Cin_p, HW)    input, channels on sublanes, pixels on lanes
    w1_ref  : (Cout_p, 9*Cin_p) conv1 weights, tap-major im2col layout
    b1_ref  : (Cout_p, 1)
    w2_ref  : (Cout_p, 9*Cout_p)
    b2_ref  : (Cout_p, 1)
    o_ref   : (1, Cout_p, HW)   lane-dense output
    """

    def im2col(act):
        # act: (C, HW) f32 -> (9*C, HW). Shifting the flattened spatial axis by
        # dh*W+dw is a pure lane rotate (XLU); border wrap-around is zeroed by the
        # precomputed masks. Sublane concat is 8-aligned (C is padded to 8).
        pieces = []
        t = 0
        for kh in range(3):
            for kw in range(3):
                off = (kh - 1) * W + (kw - 1)
                rolled = jnp.roll(act, -off, axis=1) if off != 0 else act
                pieces.append(rolled * mask_ref[t])
                t += 1
        return jnp.concatenate(pieces, axis=0)

    x = x_ref[0].astype(jnp.float32)                               # (Cin_p, HW)

    # conv1 + bias + ReLU: single MXU matmul, K = 9*Cin_p
    y = jnp.dot(w1_ref[...], im2col(x), preferred_element_type=jnp.float32)
    y = jnp.maximum(y + b1_ref[...], 0.0)                          # stays on-chip

    # conv2 + bias + ReLU: single MXU matmul, K = 9*Cout_p
    z = jnp.dot(w2_ref[...], im2col(y), preferred_element_type=jnp.float32)
    z = jnp.maximum(z + b2_ref[...], 0.0)

    o_ref[0] = z.astype(o_ref.dtype)                               # lane-dense store


def _pack_weight(w_oihw, cin_p, cout_p):
    """(Cout, Cin, 3, 3) OIHW -> (Cout_p, 9*Cin_p) matching the kernel's im2col order."""
    cout, cin = w_oihw.shape[0], w_oihw.shape[1]
    w = jnp.transpose(w_oihw, (0, 2, 3, 1))                        # (Cout, 3, 3, Cin)
    w = jnp.pad(w, ((0, cout_p - cout), (0, 0), (0, 0), (0, cin_p - cin)))
    return w.reshape(cout_p, 9 * cin_p).astype(jnp.float32)


def _pack_bias(b, cout_p):
    return jnp.pad(b.reshape(-1, 1), ((0, cout_p - b.shape[0]), (0, 0))).astype(jnp.float32)


def convx2_forward(x_nchw, w1_oihw, b1, w2_oihw, b2):
    """Convx2.forward with bn=False: relu(conv1(x)+b1) -> relu(conv2(.)+b2). NCHW in/out."""
    N, Cin, H, W = x_nchw.shape
    Cout = w1_oihw.shape[0]
    HW = H * W
    cin_p = _round_up(Cin, 8)
    cout_p = _round_up(Cout, 8)

    # Flatten spatial dims onto the lane axis (free, contiguous collapse); pad channels
    # to the sublane tile. No spatial pad, no activation transposes.
    xr = x_nchw.reshape(N, Cin, HW)
    if cin_p != Cin:
        xr = jnp.pad(xr, ((0, 0), (0, cin_p - Cin), (0, 0)))

    tap_masks = jnp.asarray(_make_tap_masks(H, W))                 # (9, 1, HW) constant
    w1m = _pack_weight(w1_oihw, cin_p, cout_p)
    b1m = _pack_bias(b1, cout_p)
    w2m = _pack_weight(w2_oihw, cout_p, cout_p)
    b2m = _pack_bias(b2, cout_p)

    kernel = functools.partial(_convx2_kernel, W=W)

    flops = 2 * N * HW * 9 * (cin_p * cout_p + cout_p * cout_p)
    bytes_accessed = 4 * (xr.size + tap_masks.size + w1m.size + b1m.size
                          + w2m.size + b2m.size + N * cout_p * HW)

    out = pl.pallas_call(
        kernel,
        out_shape=jax.ShapeDtypeStruct((N, cout_p, HW), x_nchw.dtype),
        grid=(N,),
        in_specs=[
            pl.BlockSpec((9, 1, HW), lambda n: (0, 0, 0)),
            pl.BlockSpec((1, cin_p, HW), lambda n: (n, 0, 0)),
            pl.BlockSpec((cout_p, 9 * cin_p), lambda n: (0, 0)),
            pl.BlockSpec((cout_p, 1), lambda n: (0, 0)),
            pl.BlockSpec((cout_p, 9 * cout_p), lambda n: (0, 0)),
            pl.BlockSpec((cout_p, 1), lambda n: (0, 0)),
        ],
        out_specs=pl.BlockSpec((1, cout_p, HW), lambda n: (n, 0, 0)),
        compiler_params=pltpu.CompilerParams(dimension_semantics=("parallel",)),
        cost_estimate=pl.CostEstimate(flops=flops, transcendentals=0,
                                      bytes_accessed=bytes_accessed),
    )(tap_masks, xr, w1m, b1m, w2m, b2m)

    out = out.reshape(N, cout_p, H, W)
    if cout_p != Cout:
        out = out[:, :Cout]
    return out


def _reference_forward(x_nchw, w1, b1, w2, b2):
    """Pure-JAX NCHW reference mirroring the PyTorch ops."""
    def conv_relu(x, w, b):
        y = jax.lax.conv_general_dilated(
            x, w, window_strides=(1, 1), padding=((1, 1), (1, 1)),
            dimension_numbers=('NCHW', 'OIHW', 'NCHW'))
        return jnp.maximum(y + b[None, :, None, None], 0.0)
    return conv_relu(conv_relu(x_nchw, w1, b1), w2, b2)


def _init_conv_params(key, c_in, c_out):
    """Deterministic PyTorch-style init: U(-1/sqrt(fan_in), 1/sqrt(fan_in))."""
    kw_key, b_key = jax.random.split(key)
    fan_in = c_in * 3 * 3
    bound = 1.0 / jnp.sqrt(fan_in)
    w = jax.random.uniform(kw_key, (c_out, c_in, 3, 3), jnp.float32,
                           minval=-bound, maxval=bound)
    b = jax.random.uniform(b_key, (c_out,), jnp.float32,
                           minval=-bound, maxval=bound)
    return w, b


if __name__ == "__main__":
    key = jax.random.PRNGKey(0)
    k_x, k_c1, k_c2 = jax.random.split(key, 3)

    N, C_IN, C_OUT, H, W = 2, 4, 8, 16, 16
    x = jax.random.normal(k_x, (N, C_IN, H, W), jnp.float32)
    w1, b1 = _init_conv_params(k_c1, C_IN, C_OUT)
    w2, b2 = _init_conv_params(k_c2, C_OUT, C_OUT)

    out = jax.jit(convx2_forward)(x, w1, b1, w2, b2)
    out = jax.block_until_ready(out)

    ref = _reference_forward(x, w1, b1, w2, b2)
    assert out.shape == (N, C_OUT, H, W), out.shape
    assert jnp.allclose(out, ref, atol=5e-4, rtol=5e-4), \
        float(jnp.max(jnp.abs(out - ref)))

    print("KERNEL_OK")
</pallas_src>

<mosaic_0001>
module attributes {stable_mosaic.version = 11 : i64} {
  func.func @_convx2_kernel(%arg0: i32, %arg1: memref<9x1x256xf32, #tpu.memory_space<vmem>>, %arg2: memref<1x8x256xf32, #tpu.memory_space<vmem>>, %arg3: memref<8x72xf32, #tpu.memory_space<vmem>>, %arg4: memref<8x1xf32, #tpu.memory_space<vmem>>, %arg5: memref<8x72xf32, #tpu.memory_space<vmem>>, %arg6: memref<8x1xf32, #tpu.memory_space<vmem>>, %arg7: memref<1x8x256xf32, #tpu.memory_space<vmem>>) attributes {dimension_semantics = [#tpu.dimension_semantics<parallel>], iteration_bounds = array<i64: 2>, scalar_prefetch = 0 : i64, scratch_operands = 0 : i64, tpu.core_type = #tpu.core_type<tc>, window_params = [{pipeline_mode = #tpu.pipeline_mode<synchronous>, transform_indices = @transform_0, window_bounds = array<i64: 9, 1, 256>}, {transform_indices = @transform_1, window_bounds = array<i64: 1, 8, 256>}, {pipeline_mode = #tpu.pipeline_mode<synchronous>, transform_indices = @transform_2, window_bounds = array<i64: 8, 72>}, {pipeline_mode = #tpu.pipeline_mode<synchronous>, transform_indices = @transform_3, window_bounds = array<i64: 8, 1>}, {pipeline_mode = #tpu.pipeline_mode<synchronous>, transform_indices = @transform_4, window_bounds = array<i64: 8, 72>}, {pipeline_mode = #tpu.pipeline_mode<synchronous>, transform_indices = @transform_5, window_bounds = array<i64: 8, 1>}, {transform_indices = @transform_6, window_bounds = array<i64: 1, 8, 256>}]} {
    %c0 = arith.constant 0 : index
    %c0_0 = arith.constant 0 : index
    %c0_1 = arith.constant 0 : index
    %0 = vector.load %arg2[%c0, %c0_0, %c0_1] : memref<1x8x256xf32, #tpu.memory_space<vmem>>, vector<1x8x256xf32>
    %1 = vector.shape_cast %0 : vector<1x8x256xf32> to vector<8x256xf32>
    %c0_2 = arith.constant 0 : index
    %c0_3 = arith.constant 0 : index
    %2 = vector.load %arg3[%c0_2, %c0_3] : memref<8x72xf32, #tpu.memory_space<vmem>>, vector<8x72xf32>
    %3 = vector.extract_strided_slice %1 {offsets = [0, 239], sizes = [8, 17], strides = [1, 1]} : vector<8x256xf32> to vector<8x17xf32>
    %4 = vector.extract_strided_slice %1 {offsets = [0, 0], sizes = [8, 239], strides = [1, 1]} : vector<8x256xf32> to vector<8x239xf32>
    %5 = tpu.concatenate %3, %4 in 1 : vector<8x17xf32>, vector<8x239xf32> -> vector<8x256xf32>
    %c0_4 = arith.constant 0 : index
    %c0_5 = arith.constant 0 : index
    %c0_6 = arith.constant 0 : index
    %6 = vector.load %arg1[%c0_4, %c0_5, %c0_6] : memref<9x1x256xf32, #tpu.memory_space<vmem>>, vector<1x1x256xf32>
    %7 = vector.shape_cast %6 : vector<1x1x256xf32> to vector<1x256xf32>
    %8 = vector.broadcast %7 : vector<1x256xf32> to vector<8x256xf32>
    %9 = arith.mulf %5, %8 : vector<8x256xf32>
    %10 = vector.extract_strided_slice %1 {offsets = [0, 240], sizes = [8, 16], strides = [1, 1]} : vector<8x256xf32> to vector<8x16xf32>
    %11 = vector.extract_strided_slice %1 {offsets = [0, 0], sizes = [8, 240], strides = [1, 1]} : vector<8x256xf32> to vector<8x240xf32>
    %12 = tpu.concatenate %10, %11 in 1 : vector<8x16xf32>, vector<8x240xf32> -> vector<8x256xf32>
    %c1 = arith.constant 1 : index
    %c0_7 = arith.constant 0 : index
    %c0_8 = arith.constant 0 : index
    %13 = vector.load %arg1[%c1, %c0_7, %c0_8] : memref<9x1x256xf32, #tpu.memory_space<vmem>>, vector<1x1x256xf32>
    %14 = vector.shape_cast %13 : vector<1x1x256xf32> to vector<1x256xf32>
    %15 = vector.broadcast %14 : vector<1x256xf32> to vector<8x256xf32>
    %16 = arith.mulf %12, %15 : vector<8x256xf32>
    %17 = vector.extract_strided_slice %1 {offsets = [0, 241], sizes = [8, 15], strides = [1, 1]} : vector<8x256xf32> to vector<8x15xf32>
    %18 = vector.extract_strided_slice %1 {offsets = [0, 0], sizes = [8, 241], strides = [1, 1]} : vector<8x256xf32> to vector<8x241xf32>
    %19 = tpu.concatenate %17, %18 in 1 : vector<8x15xf32>, vector<8x241xf32> -> vector<8x256xf32>
    %c2 = arith.constant 2 : index
    %c0_9 = arith.constant 0 : index
    %c0_10 = arith.constant 0 : index
    %20 = vector.load %arg1[%c2, %c0_9, %c0_10] : memref<9x1x256xf32, #tpu.memory_space<vmem>>, vector<1x1x256xf32>
    %21 = vector.shape_cast %20 : vector<1x1x256xf32> to vector<1x256xf32>
    %22 = vector.broadcast %21 : vector<1x256xf32> to vector<8x256xf32>
    %23 = arith.mulf %19, %22 : vector<8x256xf32>
    %24 = vector.extract_strided_slice %1 {offsets = [0, 255], sizes = [8, 1], strides = [1, 1]} : vector<8x256xf32> to vector<8x1xf32>
    %25 = vector.extract_strided_slice %1 {offsets = [0, 0], sizes = [8, 255], strides = [1, 1]} : vector<8x256xf32> to vector<8x255xf32>
    %26 = tpu.concatenate %24, %25 in 1 : vector<8x1xf32>, vector<8x255xf32> -> vector<8x256xf32>
    %c3 = arith.constant 3 : index
    %c0_11 = arith.constant 0 : index
    %c0_12 = arith.constant 0 : index
    %27 = vector.load %arg1[%c3, %c0_11, %c0_12] : memref<9x1x256xf32, #tpu.memory_space<vmem>>, vector<1x1x256xf32>
    %28 = vector.shape_cast %27 : vector<1x1x256xf32> to vector<1x256xf32>
    %29 = vector.broadcast %28 : vector<1x256xf32> to vector<8x256xf32>
    %30 = arith.mulf %26, %29 : vector<8x256xf32>
    %c4 = arith.constant 4 : index
    %c0_13 = arith.constant 0 : index
    %c0_14 = arith.constant 0 : index
    %31 = vector.load %arg1[%c4, %c0_13, %c0_14] : memref<9x1x256xf32, #tpu.memory_space<vmem>>, vector<1x1x256xf32>
    %32 = vector.shape_cast %31 : vector<1x1x256xf32> to vector<1x256xf32>
    %33 = vector.broadcast %32 : vector<1x256xf32> to vector<8x256xf32>
    %34 = arith.mulf %1, %33 : vector<8x256xf32>
    %35 = vector.extract_strided_slice %1 {offsets = [0, 1], sizes = [8, 255], strides = [1, 1]} : vector<8x256xf32> to vector<8x255xf32>
    %36 = vector.extract_strided_slice %1 {offsets = [0, 0], sizes = [8, 1], strides = [1, 1]} : vector<8x256xf32> to vector<8x1xf32>
    %37 = tpu.concatenate %35, %36 in 1 : vector<8x255xf32>, vector<8x1xf32> -> vector<8x256xf32>
    %c5 = arith.constant 5 : index
    %c0_15 = arith.constant 0 : index
    %c0_16 = arith.constant 0 : index
    %38 = vector.load %arg1[%c5, %c0_15, %c0_16] : memref<9x1x256xf32, #tpu.memory_space<vmem>>, vector<1x1x256xf32>
    %39 = vector.shape_cast %38 : vector<1x1x256xf32> to vector<1x256xf32>
    %40 = vector.broadcast %39 : vector<1x256xf32> to vector<8x256xf32>
    %41 = arith.mulf %37, %40 : vector<8x256xf32>
    %42 = vector.extract_strided_slice %1 {offsets = [0, 15], sizes = [8, 241], strides = [1, 1]} : vector<8x256xf32> to vector<8x241xf32>
    %43 = vector.extract_strided_slice %1 {offsets = [0, 0], sizes = [8, 15], strides = [1, 1]} : vector<8x256xf32> to vector<8x15xf32>
    %44 = tpu.concatenate %42, %43 in 1 : vector<8x241xf32>, vector<8x15xf32> -> vector<8x256xf32>
    %c6 = arith.constant 6 : index
    %c0_17 = arith.constant 0 : index
    %c0_18 = arith.constant 0 : index
    %45 = vector.load %arg1[%c6, %c0_17, %c0_18] : memref<9x1x256xf32, #tpu.memory_space<vmem>>, vector<1x1x256xf32>
    %46 = vector.shape_cast %45 : vector<1x1x256xf32> to vector<1x256xf32>
    %47 = vector.broadcast %46 : vector<1x256xf32> to vector<8x256xf32>
    %48 = arith.mulf %44, %47 : vector<8x256xf32>
    %49 = vector.extract_strided_slice %1 {offsets = [0, 16], sizes = [8, 240], strides = [1, 1]} : vector<8x256xf32> to vector<8x240xf32>
    %50 = vector.extract_strided_slice %1 {offsets = [0, 0], sizes = [8, 16], strides = [1, 1]} : vector<8x256xf32> to vector<8x16xf32>
    %51 = tpu.concatenate %49, %50 in 1 : vector<8x240xf32>, vector<8x16xf32> -> vector<8x256xf32>
    %c7 = arith.constant 7 : index
    %c0_19 = arith.constant 0 : index
    %c0_20 = arith.constant 0 : index
    %52 = vector.load %arg1[%c7, %c0_19, %c0_20] : memref<9x1x256xf32, #tpu.memory_space<vmem>>, vector<1x1x256xf32>
    %53 = vector.shape_cast %52 : vector<1x1x256xf32> to vector<1x256xf32>
    %54 = vector.broadcast %53 : vector<1x256xf32> to vector<8x256xf32>
    %55 = arith.mulf %51, %54 : vector<8x256xf32>
    %56 = vector.extract_strided_slice %1 {offsets = [0, 17], sizes = [8, 239], strides = [1, 1]} : vector<8x256xf32> to vector<8x239xf32>
    %57 = vector.extract_strided_slice %1 {offsets = [0, 0], sizes = [8, 17], strides = [1, 1]} : vector<8x256xf32> to vector<8x17xf32>
    %58 = tpu.concatenate %56, %57 in 1 : vector<8x239xf32>, vector<8x17xf32> -> vector<8x256xf32>
    %c8 = arith.constant 8 : index
    %c0_21 = arith.constant 0 : index
    %c0_22 = arith.constant 0 : index
    %59 = vector.load %arg1[%c8, %c0_21, %c0_22] : memref<9x1x256xf32, #tpu.memory_space<vmem>>, vector<1x1x256xf32>
    %60 = vector.shape_cast %59 : vector<1x1x256xf32> to vector<1x256xf32>
    %61 = vector.broadcast %60 : vector<1x256xf32> to vector<8x256xf32>
    %62 = arith.mulf %58, %61 : vector<8x256xf32>
    %63 = tpu.concatenate %9, %16, %23, %30, %34, %41, %48, %55, %62 in 0 : vector<8x256xf32>, vector<8x256xf32>, vector<8x256xf32>, vector<8x256xf32>, vector<8x256xf32>, vector<8x256xf32>, vector<8x256xf32>, vector<8x256xf32>, vector<8x256xf32> -> vector<72x256xf32>
    %cst = arith.constant dense<0.000000e+00> : vector<8x256xf32>
    %64 = tpu.matmul %2, %63, %cst {dimension_numbers = #tpu.dot_dimension_numbers<[1], [0], [0], [1], [0, 0, 1, 1], [], []>} : vector<8x72xf32>, vector<72x256xf32>, vector<8x256xf32> -> vector<8x256xf32>
    %c0_23 = arith.constant 0 : index
    %c0_24 = arith.constant 0 : index
    %65 = vector.load %arg4[%c0_23, %c0_24] : memref<8x1xf32, #tpu.memory_space<vmem>>, vector<8x1xf32>
    %66 = vector.broadcast %65 : vector<8x1xf32> to vector<8x256xf32>
    %67 = arith.addf %64, %66 : vector<8x256xf32>
    %cst_25 = arith.constant 0.000000e+00 : f32
    %68 = vector.broadcast %cst_25 : f32 to vector<8x256xf32>
    %69 = arith.maximumf %67, %68 : vector<8x256xf32>
    %c0_26 = arith.constant 0 : index
    %c0_27 = arith.constant 0 : index
    %70 = vector.load %arg5[%c0_26, %c0_27] : memref<8x72xf32, #tpu.memory_space<vmem>>, vector<8x72xf32>
    %71 = vector.extract_strided_slice %69 {offsets = [0, 239], sizes = [8, 17], strides = [1, 1]} : vector<8x256xf32> to vector<8x17xf32>
    %72 = vector.extract_strided_slice %69 {offsets = [0, 0], sizes = [8, 239], strides = [1, 1]} : vector<8x256xf32> to vector<8x239xf32>
    %73 = tpu.concatenate %71, %72 in 1 : vector<8x17xf32>, vector<8x239xf32> -> vector<8x256xf32>
    %c0_28 = arith.constant 0 : index
    %c0_29 = arith.constant 0 : index
    %c0_30 = arith.constant 0 : index
    %74 = vector.load %arg1[%c0_28, %c0_29, %c0_30] : memref<9x1x256xf32, #tpu.memory_space<vmem>>, vector<1x1x256xf32>
    %75 = vector.shape_cast %74 : vector<1x1x256xf32> to vector<1x256xf32>
    %76 = vector.broadcast %75 : vector<1x256xf32> to vector<8x256xf32>
    %77 = arith.mulf %73, %76 : vector<8x256xf32>
    %78 = vector.extract_strided_slice %69 {offsets = [0, 240], sizes = [8, 16], strides = [1, 1]} : vector<8x256xf32> to vector<8x16xf32>
    %79 = vector.extract_strided_slice %69 {offsets = [0, 0], sizes = [8, 240], strides = [1, 1]} : vector<8x256xf32> to vector<8x240xf32>
    %80 = tpu.concatenate %78, %79 in 1 : vector<8x16xf32>, vector<8x240xf32> -> vector<8x256xf32>
    %c1_31 = arith.constant 1 : index
    %c0_32 = arith.constant 0 : index
    %c0_33 = arith.constant 0 : index
    %81 = vector.load %arg1[%c1_31, %c0_32, %c0_33] : memref<9x1x256xf32, #tpu.memory_space<vmem>>, vector<1x1x256xf32>
    %82 = vector.shape_cast %81 : vector<1x1x256xf32> to vector<1x256xf32>
    %83 = vector.broadcast %82 : vector<1x256xf32> to vector<8x256xf32>
    %84 = arith.mulf %80, %83 : vector<8x256xf32>
    %85 = vector.extract_strided_slice %69 {offsets = [0, 241], sizes = [8, 15], strides = [1, 1]} : vector<8x256xf32> to vector<8x15xf32>
    %86 = vector.extract_strided_slice %69 {offsets = [0, 0], sizes = [8, 241], strides = [1, 1]} : vector<8x256xf32> to vector<8x241xf32>
    %87 = tpu.concatenate %85, %86 in 1 : vector<8x15xf32>, vector<8x241xf32> -> vector<8x256xf32>
    %c2_34 = arith.constant 2 : index
    %c0_35 = arith.constant 0 : index
    %c0_36 = arith.constant 0 : index
    %88 = vector.load %arg1[%c2_34, %c0_35, %c0_36] : memref<9x1x256xf32, #tpu.memory_space<vmem>>, vector<1x1x256xf32>
    %89 = vector.shape_cast %88 : vector<1x1x256xf32> to vector<1x256xf32>
    %90 = vector.broadcast %89 : vector<1x256xf32> to vector<8x256xf32>
    %91 = arith.mulf %87, %90 : vector<8x256xf32>
    %92 = vector.extract_strided_slice %69 {offsets = [0, 255], sizes = [8, 1], strides = [1, 1]} : vector<8x256xf32> to vector<8x1xf32>
    %93 = vector.extract_strided_slice %69 {offsets = [0, 0], sizes = [8, 255], strides = [1, 1]} : vector<8x256xf32> to vector<8x255xf32>
    %94 = tpu.concatenate %92, %93 in 1 : vector<8x1xf32>, vector<8x255xf32> -> vector<8x256xf32>
    %c3_37 = arith.constant 3 : index
    %c0_38 = arith.constant 0 : index
    %c0_39 = arith.constant 0 : index
    %95 = vector.load %arg1[%c3_37, %c0_38, %c0_39] : memref<9x1x256xf32, #tpu.memory_space<vmem>>, vector<1x1x256xf32>
    %96 = vector.shape_cast %95 : vector<1x1x256xf32> to vector<1x256xf32>
    %97 = vector.broadcast %96 : vector<1x256xf32> to vector<8x256xf32>
    %98 = arith.mulf %94, %97 : vector<8x256xf32>
    %c4_40 = arith.constant 4 : index
    %c0_41 = arith.constant 0 : index
    %c0_42 = arith.constant 0 : index
    %99 = vector.load %arg1[%c4_40, %c0_41, %c0_42] : memref<9x1x256xf32, #tpu.memory_space<vmem>>, vector<1x1x256xf32>
    %100 = vector.shape_cast %99 : vector<1x1x256xf32> to vector<1x256xf32>
    %101 = vector.broadcast %100 : vector<1x256xf32> to vector<8x256xf32>
    %102 = arith.mulf %69, %101 : vector<8x256xf32>
    %103 = vector.extract_strided_slice %69 {offsets = [0, 1], sizes = [8, 255], strides = [1, 1]} : vector<8x256xf32> to vector<8x255xf32>
    %104 = vector.extract_strided_slice %69 {offsets = [0, 0], sizes = [8, 1], strides = [1, 1]} : vector<8x256xf32> to vector<8x1xf32>
    %105 = tpu.concatenate %103, %104 in 1 : vector<8x255xf32>, vector<8x1xf32> -> vector<8x256xf32>
    %c5_43 = arith.constant 5 : index
    %c0_44 = arith.constant 0 : index
    %c0_45 = arith.constant 0 : index
    %106 = vector.load %arg1[%c5_43, %c0_44, %c0_45] : memref<9x1x256xf32, #tpu.memory_space<vmem>>, vector<1x1x256xf32>
    %107 = vector.shape_cast %106 : vector<1x1x256xf32> to vector<1x256xf32>
    %108 = vector.broadcast %107 : vector<1x256xf32> to vector<8x256xf32>
    %109 = arith.mulf %105, %108 : vector<8x256xf32>
    %110 = vector.extract_strided_slice %69 {offsets = [0, 15], sizes = [8, 241], strides = [1, 1]} : vector<8x256xf32> to vector<8x241xf32>
    %111 = vector.extract_strided_slice %69 {offsets = [0, 0], sizes = [8, 15], strides = [1, 1]} : vector<8x256xf32> to vector<8x15xf32>
    %112 = tpu.concatenate %110, %111 in 1 : vector<8x241xf32>, vector<8x15xf32> -> vector<8x256xf32>
    %c6_46 = arith.constant 6 : index
    %c0_47 = arith.constant 0 : index
    %c0_48 = arith.constant 0 : index
    %113 = vector.load %arg1[%c6_46, %c0_47, %c0_48] : memref<9x1x256xf32, #tpu.memory_space<vmem>>, vector<1x1x256xf32>
    %114 = vector.shape_cast %113 : vector<1x1x256xf32> to vector<1x256xf32>
    %115 = vector.broadcast %114 : vector<1x256xf32> to vector<8x256xf32>
    %116 = arith.mulf %112, %115 : vector<8x256xf32>
    %117 = vector.extract_strided_slice %69 {offsets = [0, 16], sizes = [8, 240], strides = [1, 1]} : vector<8x256xf32> to vector<8x240xf32>
    %118 = vector.extract_strided_slice %69 {offsets = [0, 0], sizes = [8, 16], strides = [1, 1]} : vector<8x256xf32> to vector<8x16xf32>
    %119 = tpu.concatenate %117, %118 in 1 : vector<8x240xf32>, vector<8x16xf32> -> vector<8x256xf32>
    %c7_49 = arith.constant 7 : index
    %c0_50 = arith.constant 0 : index
    %c0_51 = arith.constant 0 : index
    %120 = vector.load %arg1[%c7_49, %c0_50, %c0_51] : memref<9x1x256xf32, #tpu.memory_space<vmem>>, vector<1x1x256xf32>
    %121 = vector.shape_cast %120 : vector<1x1x256xf32> to vector<1x256xf32>
    %122 = vector.broadcast %121 : vector<1x256xf32> to vector<8x256xf32>
    %123 = arith.mulf %119, %122 : vector<8x256xf32>
    %124 = vector.extract_strided_slice %69 {offsets = [0, 17], sizes = [8, 239], strides = [1, 1]} : vector<8x256xf32> to vector<8x239xf32>
    %125 = vector.extract_strided_slice %69 {offsets = [0, 0], sizes = [8, 17], strides = [1, 1]} : vector<8x256xf32> to vector<8x17xf32>
    %126 = tpu.concatenate %124, %125 in 1 : vector<8x239xf32>, vector<8x17xf32> -> vector<8x256xf32>
    %c8_52 = arith.constant 8 : index
    %c0_53 = arith.constant 0 : index
    %c0_54 = arith.constant 0 : index
    %127 = vector.load %arg1[%c8_52, %c0_53, %c0_54] : memref<9x1x256xf32, #tpu.memory_space<vmem>>, vector<1x1x256xf32>
    %128 = vector.shape_cast %127 : vector<1x1x256xf32> to vector<1x256xf32>
    %129 = vector.broadcast %128 : vector<1x256xf32> to vector<8x256xf32>
    %130 = arith.mulf %126, %129 : vector<8x256xf32>
    %131 = tpu.concatenate %77, %84, %91, %98, %102, %109, %116, %123, %130 in 0 : vector<8x256xf32>, vector<8x256xf32>, vector<8x256xf32>, vector<8x256xf32>, vector<8x256xf32>, vector<8x256xf32>, vector<8x256xf32>, vector<8x256xf32>, vector<8x256xf32> -> vector<72x256xf32>
    %cst_55 = arith.constant dense<0.000000e+00> : vector<8x256xf32>
    %132 = tpu.matmul %70, %131, %cst_55 {dimension_numbers = #tpu.dot_dimension_numbers<[1], [0], [0], [1], [0, 0, 1, 1], [], []>} : vector<8x72xf32>, vector<72x256xf32>, vector<8x256xf32> -> vector<8x256xf32>
    %c0_56 = arith.constant 0 : index
    %c0_57 = arith.constant 0 : index
    %133 = vector.load %arg6[%c0_56, %c0_57] : memref<8x1xf32, #tpu.memory_space<vmem>>, vector<8x1xf32>
    %134 = vector.broadcast %133 : vector<8x1xf32> to vector<8x256xf32>
    %135 = arith.addf %132, %134 : vector<8x256xf32>
    %cst_58 = arith.constant 0.000000e+00 : f32
    %136 = vector.broadcast %cst_58 : f32 to vector<8x256xf32>
    %137 = arith.maximumf %135, %136 : vector<8x256xf32>
    %c0_59 = arith.constant 0 : index
    %c0_60 = arith.constant 0 : index
    %c0_61 = arith.constant 0 : index
    %138 = vector.load %arg7[%c0_59, %c0_60, %c0_61] : memref<1x8x256xf32, #tpu.memory_space<vmem>>, vector<1x8x256xf32>
    %139 = vector.shape_cast %138 : vector<1x8x256xf32> to vector<8x256xf32>
    %140 = vector.shape_cast %137 : vector<8x256xf32> to vector<1x8x256xf32>
    tpu.vector_store %arg7[%c0_59, %c0_60, %c0_61], %140 {strides = array<i32>} : memref<1x8x256xf32, #tpu.memory_space<vmem>>, vector<1x8x256xf32>,
    return
  }
  func.func @transform_0(%arg0: i32) -> (i32, i32, i32) {
    %c0_i32 = arith.constant 0 : i32
    %c0_i32_0 = arith.constant 0 : i32
    %c0_i32_1 = arith.constant 0 : i32
    %c0_i32_2 = arith.constant 0 : i32
    return %c0_i32, %c0_i32_0, %c0_i32_1 : i32, i32, i32
  }
  func.func @transform_1(%arg0: i32) -> (i32, i32, i32) {
    %c0_i32 = arith.constant 0 : i32
    %c0_i32_0 = arith.constant 0 : i32
    %c0_i32_1 = arith.constant 0 : i32
    return %arg0, %c0_i32, %c0_i32_0 : i32, i32, i32
  }
  func.func @transform_2(%arg0: i32) -> (i32, i32) {
    %c0_i32 = arith.constant 0 : i32
    %c0_i32_0 = arith.constant 0 : i32
    %c0_i32_1 = arith.constant 0 : i32
    return %c0_i32, %c0_i32_0 : i32, i32
  }
  func.func @transform_3(%arg0: i32) -> (i32, i32) {
    %c0_i32 = arith.constant 0 : i32
    %c0_i32_0 = arith.constant 0 : i32
    %c0_i32_1 = arith.constant 0 : i32
    return %c0_i32, %c0_i32_0 : i32, i32
  }
  func.func @transform_4(%arg0: i32) -> (i32, i32) {
    %c0_i32 = arith.constant 0 : i32
    %c0_i32_0 = arith.constant 0 : i32
    %c0_i32_1 = arith.constant 0 : i32
    return %c0_i32, %c0_i32_0 : i32, i32
  }
  func.func @transform_5(%arg0: i32) -> (i32, i32) {
    %c0_i32 = arith.constant 0 : i32
    %c0_i32_0 = arith.constant 0 : i32
    %c0_i32_1 = arith.constant 0 : i32
    return %c0_i32, %c0_i32_0 : i32, i32
  }
  func.func @transform_6(%arg0: i32) -> (i32, i32, i32) {
    %c0_i32 = arith.constant 0 : i32
    %c0_i32_0 = arith.constant 0 : i32
    %c0_i32_1 = arith.constant 0 : i32
    return %arg0, %c0_i32, %c0_i32_0 : i32, i32, i32
  }
}

</mosaic_0001>

<llo_original>
// kernel: convx2_forward.1
$region0: #{convx2_forward.1}
  #allocation0 [shape = 'u32[]', space=smem, size = 0x4, offset = 0x4, fixed_abs, tag = 'smem constant byte address 0x4 - core index']
  #allocation1 [shape = 'u32[144,128]{1,0:T(1,128)}', space=vmem, size = 0x12000, scoped, tag = 'internal scratch']
  %s0 = inlined_call_operand.vmem [shape: f32[9,1,256], index: 0, kind: input, shape index: {}]
  %s1 = inlined_call_operand.vmem [shape: f32[2,8,256], index: 1, kind: input, shape index: {}]
  %s2 = inlined_call_operand.vmem [shape: f32[8,72], index: 2, kind: input, shape index: {}]
  %s3 = inlined_call_operand.vmem [shape: f32[8,1], index: 3, kind: input, shape index: {}]
  %s4 = inlined_call_operand.vmem [shape: f32[8,72], index: 4, kind: input, shape index: {}]
  %s5 = inlined_call_operand.vmem [shape: f32[8,1], index: 5, kind: input, shape index: {}]
  %s6 = inlined_call_operand.vmem [shape: f32[2,8,256], index: 6, kind: output, shape index: {}]
  %s7 = sld [smem:[#allocation0]]
  $region57: #{convx2_forward.1} parent=0
    _
  %s9 = ssub.s32 1, %s7
  %s10 = scalar_select 0, %s9, %s7
  loop: start=0, step=1, limit=4
  $region2: #{convx2_forward.1} parent=0 // loop_pre_header
    _
  $region3: #{convx2_forward.1} parent=0 // loop_header
    %s12 = sphi 0, %s16
    %p13 = scmp.ge.s32.totalorder %s12, 4
    %s20 = sphi 0, %s20
    %s22 = sphi 0, %s20
    %s23 = sphi 0, %s22
    %s37 = sphi 0, %s23
    %s43 = sphi 0, %s45
    %s46 = sphi 0, %s43
    %s47 = sphi 0, %s46
    %s63 = sphi 0, %s47
    %s67 = sphi 0, %s67
    %s69 = sphi 0, %s67
    %s70 = sphi 0, %s69
    %s84 = sphi 0, %s70
    %s88 = sphi 0, %s88
    %s90 = sphi 0, %s88
    %s91 = sphi 0, %s90
    %s105 = sphi 0, %s91
    %s109 = sphi 0, %s109
    %s111 = sphi 0, %s109
    %s112 = sphi 0, %s111
    %s126 = sphi 0, %s112
    %s130 = sphi 0, %s130
    %s132 = sphi 0, %s130
    %s133 = sphi 0, %s132
    %s147 = sphi 0, %s133
    %s153 = sphi 0, %s155
    %s156 = sphi 0, %s153
    %s157 = sphi 0, %s156
    %s173 = sphi 0, %s157
  $region4: #{convx2_forward.1} parent=0 // loop_header_branch
    %15 = sbr.rel (%p13) target = $region8
  $region5: #{convx2_forward.1} parent=0 // loop_body
    %s17 = ssub.s32 %s12, 1
    %s18 = ssub.s32 %s12, 2
    %s19 = sadd.s32 %s12, 1
    %s21 = sadd.s32 %s20, 1
    %p24 = scmp.eq.s32.totalorder %s12, 1
    %p25 = scmp.ne.s32.totalorder %s20, %s22
    %p26 = scmp.eq.s32.totalorder %s12, 0
    %p27 = por %p25, %p26
    %p28 = scmp.ne.s32.totalorder %s20, %s22
    %p29 = scmp.eq.s32.totalorder %s17, 1
    %p30 = por %p28, %p29
    %p31 = scmp.ne.s32.totalorder %s22, %s23
    %p32 = scmp.eq.s32.totalorder %s17, 0
    %p33 = por %p31, %p32
    %p34 = scmp.ne.s32.totalorder %s22, %s23
    %p35 = scmp.eq.s32.totalorder %s18, 1
    %p36 = por %p34, %p35
    %p38 = scmp.ne.s32.totalorder %s23, %s37
    %p39 = scmp.eq.s32.totalorder %s18, 0
    %p40 = por %p38, %p39
    %s41 = ssub.s32 %s12, %s19
    %p42 = scmp.eq.s32.totalorder %s41, 0
    %s44 = sadd.s32 %s43, 1
    %s45 = scalar_select %p42, %s43, %s44
    %p48 = pneg %p42
    %p49 = scmp.eq.s32.totalorder %s12, 1
    %p50 = por %p48, %p49
    %p51 = scmp.ne.s32.totalorder %s43, %s46
    %p52 = scmp.eq.s32.totalorder %s12, 0
    %p53 = por %p51, %p52
    %p54 = scmp.ne.s32.totalorder %s43, %s46
    %p55 = scmp.eq.s32.totalorder %s17, 1
    %p56 = por %p54, %p55
    %p57 = scmp.ne.s32.totalorder %s46, %s47
    %p58 = scmp.eq.s32.totalorder %s17, 0
    %p59 = por %p57, %p58
    %p60 = scmp.ne.s32.totalorder %s46, %s47
    %p61 = scmp.eq.s32.totalorder %s18, 1
    %p62 = por %p60, %p61
    %p64 = scmp.ne.s32.totalorder %s47, %s63
    %p65 = scmp.eq.s32.totalorder %s18, 0
    %p66 = por %p64, %p65
    %s68 = sadd.s32 %s67, 1
    %p71 = scmp.eq.s32.totalorder %s12, 1
    %p72 = scmp.ne.s32.totalorder %s67, %s69
    %p73 = scmp.eq.s32.totalorder %s12, 0
    %p74 = por %p72, %p73
    %p75 = scmp.ne.s32.totalorder %s67, %s69
    %p76 = scmp.eq.s32.totalorder %s17, 1
    %p77 = por %p75, %p76
    %p78 = scmp.ne.s32.totalorder %s69, %s70
    %p79 = scmp.eq.s32.totalorder %s17, 0
    %p80 = por %p78, %p79
    %p81 = scmp.ne.s32.totalorder %s69, %s70
    %p82 = scmp.eq.s32.totalorder %s18, 1
    %p83 = por %p81, %p82
    %p85 = scmp.ne.s32.totalorder %s70, %s84
    %p86 = scmp.eq.s32.totalorder %s18, 0
    %p87 = por %p85, %p86
    %s89 = sadd.s32 %s88, 1
    %p92 = scmp.eq.s32.totalorder %s12, 1
    %p93 = scmp.ne.s32.totalorder %s88, %s90
    %p94 = scmp.eq.s32.totalorder %s12, 0
    %p95 = por %p93, %p94
    %p96 = scmp.ne.s32.totalorder %s88, %s90
    %p97 = scmp.eq.s32.totalorder %s17, 1
    %p98 = por %p96, %p97
    %p99 = scmp.ne.s32.totalorder %s90, %s91
    %p100 = scmp.eq.s32.totalorder %s17, 0
    %p101 = por %p99, %p100
    %p102 = scmp.ne.s32.totalorder %s90, %s91
    %p103 = scmp.eq.s32.totalorder %s18, 1
    %p104 = por %p102, %p103
    %p106 = scmp.ne.s32.totalorder %s91, %s105
    %p107 = scmp.eq.s32.totalorder %s18, 0
    %p108 = por %p106, %p107
    %s110 = sadd.s32 %s109, 1
    %p113 = scmp.eq.s32.totalorder %s12, 1
    %p114 = scmp.ne.s32.totalorder %s109, %s111
    %p115 = scmp.eq.s32.totalorder %s12, 0
    %p116 = por %p114, %p115
    %p117 = scmp.ne.s32.totalorder %s109, %s111
    %p118 = scmp.eq.s32.totalorder %s17, 1
    %p119 = por %p117, %p118
    %p120 = scmp.ne.s32.totalorder %s111, %s112
    %p121 = scmp.eq.s32.totalorder %s17, 0
    %p122 = por %p120, %p121
    %p123 = scmp.ne.s32.totalorder %s111, %s112
    %p124 = scmp.eq.s32.totalorder %s18, 1
    %p125 = por %p123, %p124
    %p127 = scmp.ne.s32.totalorder %s112, %s126
    %p128 = scmp.eq.s32.totalorder %s18, 0
    %p129 = por %p127, %p128
    %s131 = sadd.s32 %s130, 1
    %p134 = scmp.eq.s32.totalorder %s12, 1
    %p135 = scmp.ne.s32.totalorder %s130, %s132
    %p136 = scmp.eq.s32.totalorder %s12, 0
    %p137 = por %p135, %p136
    %p138 = scmp.ne.s32.totalorder %s130, %s132
    %p139 = scmp.eq.s32.totalorder %s17, 1
    %p140 = por %p138, %p139
    %p141 = scmp.ne.s32.totalorder %s132, %s133
    %p142 = scmp.eq.s32.totalorder %s17, 0
    %p143 = por %p141, %p142
    %p144 = scmp.ne.s32.totalorder %s132, %s133
    %p145 = scmp.eq.s32.totalorder %s18, 1
    %p146 = por %p144, %p145
    %p148 = scmp.ne.s32.totalorder %s133, %s147
    %p149 = scmp.eq.s32.totalorder %s18, 0
    %p150 = por %p148, %p149
    %s151 = ssub.s32 %s12, %s19
    %p152 = scmp.eq.s32.totalorder %s151, 0
    %s154 = sadd.s32 %s153, 1
    %s155 = scalar_select %p152, %s153, %s154
    %p158 = pneg %p152
    %p159 = scmp.eq.s32.totalorder %s12, 1
    %p160 = por %p158, %p159
    %p161 = scmp.ne.s32.totalorder %s153, %s156
    %p162 = scmp.eq.s32.totalorder %s12, 0
    %p163 = por %p161, %p162
    %p164 = scmp.ne.s32.totalorder %s153, %s156
    %p165 = scmp.eq.s32.totalorder %s17, 1
    %p166 = por %p164, %p165
    %p167 = scmp.ne.s32.totalorder %s156, %s157
    %p168 = scmp.eq.s32.totalorder %s17, 0
    %p169 = por %p167, %p168
    %p170 = scmp.ne.s32.totalorder %s156, %s157
    %p171 = scmp.eq.s32.totalorder %s18, 1
    %p172 = por %p170, %p171
    %p174 = scmp.ne.s32.totalorder %s157, %s173
    %p175 = scmp.eq.s32.totalorder %s18, 0
    %p176 = por %p174, %p175
    %p177 = scmp.le.s32.totalorder 1, %s12
    %p178 = scmp.lt.s32.totalorder %s12, 3
    %p179 = pnand %p177, %p178
    %p180 = pneg %p179
    // Predicated region
    $region9: #{convx2_forward.1} parent=5 // pred_check
      _
    $region10: #{convx2_forward.1} parent=5 // pred_check_branch
      %182 = sbr.rel (%p179) target = $region12
    $region11: #{convx2_forward.1} parent=5 // pred_region
      %s183 = ssub.s32 %s12, 1
      // Predicated region
      $region13: #{convx2_forward.1} parent=11 // pred_check
        %p184 = pneg %p33
      $region14: #{convx2_forward.1} parent=11 // pred_check_branch
        %186 = sbr.rel (%p184) target = $region16
      $region15: #{convx2_forward.1} parent=11 // pred_region
        _
      $region16: #{convx2_forward.1} parent=11 // pred_fallthru
        _
      // Predicated region
      $region17: #{convx2_forward.1} parent=11 // pred_check
        %p187 = pneg %p80
      $region18: #{convx2_forward.1} parent=11 // pred_check_branch
        %189 = sbr.rel (%p187) target = $region20
      $region19: #{convx2_forward.1} parent=11 // pred_region
        _
      $region20: #{convx2_forward.1} parent=11 // pred_fallthru
        _
      // Predicated region
      $region21: #{convx2_forward.1} parent=11 // pred_check
        %p190 = pneg %p101
      $region22: #{convx2_forward.1} parent=11 // pred_check_branch
        %192 = sbr.rel (%p190) target = $region24
      $region23: #{convx2_forward.1} parent=11 // pred_region
        _
      $region24: #{convx2_forward.1} parent=11 // pred_fallthru
        _
      // Predicated region
      $region25: #{convx2_forward.1} parent=11 // pred_check
        %p193 = pneg %p122
      $region26: #{convx2_forward.1} parent=11 // pred_check_branch
        %195 = sbr.rel (%p193) target = $region28
      $region27: #{convx2_forward.1} parent=11 // pred_region
        _
      $region28: #{convx2_forward.1} parent=11 // pred_fallthru
        _
      // Predicated region
      $region29: #{convx2_forward.1} parent=11 // pred_check
        %p196 = pneg %p143
      $region30: #{convx2_forward.1} parent=11 // pred_check_branch
        %198 = sbr.rel (%p196) target = $region32
      $region31: #{convx2_forward.1} parent=11 // pred_region
        _
      $region32: #{convx2_forward.1} parent=11 // pred_fallthru
        _
    $region12: #{convx2_forward.1} parent=5 // pred_fallthru
      _
    %p199 = scmp.lt.s32.totalorder %s12, 2
    // Predicated region
    $region33: #{convx2_forward.1} parent=5 // pred_check
      %p200 = pneg %p199
    $region34: #{convx2_forward.1} parent=5 // pred_check_branch
      %202 = sbr.rel (%p200) target = $region36
    $region35: #{convx2_forward.1} parent=5 // pred_region
      // Predicated region
      $region37: #{convx2_forward.1} parent=35 // pred_check
        %p203 = pneg %p53
      $region38: #{convx2_forward.1} parent=35 // pred_check_branch
        %205 = sbr.rel (%p203) target = $region40
      $region39: #{convx2_forward.1} parent=35 // pred_region
        %p206 = scmp.lt.s32.totalorder %s12, 1
        %s207 = scalar_select %p206, %s12, 1
        %s208 = smul.addr %s207, 2
        %s209 = smul.addr %s208, 8
        %s210 = scalar_lea.vmem %s1, %s209
      $region40: #{convx2_forward.1} parent=35 // pred_fallthru
        _
    $region36: #{convx2_forward.1} parent=5 // pred_fallthru
      _
    %p211 = scmp.le.s32.totalorder 1, %s12
    %p212 = scmp.lt.s32.totalorder %s12, 3
    %p213 = pnand %p211, %p212
    %p214 = pneg %p213
    // Predicated region
    $region41: #{convx2_forward.1} parent=5 // pred_check
      _
    $region42: #{convx2_forward.1} parent=5 // pred_check_branch
      %216 = sbr.rel (%p213) target = $region44
    $region43: #{convx2_forward.1} parent=5 // pred_region
      %s217 = ssub.s32 %s12, 1
      %p218 = pneg %p33
      %p219 = pneg %p30
      %p220 = scmp.lt.s32.totalorder %s17, 1
      %s221 = scalar_select %p220, %s17, 1
      %s222 = smul.addr %s221, 2
      %s223 = smul.addr %s222, 8
      %s224 = scalar_lea.vmem %s1, %s223
      %p225 = pneg %p59
      %p226 = pneg %p56
      %p227 = pneg %p80
      %p228 = pneg %p77
      %p229 = pneg %p101
      %p230 = pneg %p98
      %p231 = pneg %p122
      %p232 = pneg %p119
      %p233 = pneg %p143
      %p234 = pneg %p140
      %p235 = pneg %p169
      %p236 = pneg %p166
      %p237 = scmp.lt.s32.totalorder %s17, 1
      %s238 = scalar_select %p237, %s17, 1
      %s239 = smul.addr %s238, 2
      %s240 = smul.addr %s239, 8
      %s241 = scalar_lea.vmem %s6, %s240
      %p242 = scmp.lt.s32.totalorder %s17, 1
      %s243 = scalar_select %p242, %s17, 1
      %s244 = smul.addr %s243, 2
      %s245 = smul.addr %s244, 8
      %s246 = scalar_lea.vmem %s1, %s245
      %p247 = scmp.lt.s32.totalorder %s17, 1
      %s248 = scalar_select %p247, %s17, 1
      %s249 = smul.addr %s248, 2
      %s250 = smul.addr %s249, 8
      %s251 = scalar_lea.vmem %s6, %s250
      %v252 = vld [vmem:[%s246] sm:$0xff]
      %v253 = vld [vmem:[%s246 + $0x8] sm:$0xff]
      %v254 = vld [vmem:[%s2] sm:$0xff]
      %256 = vrot.lane.b32.xlu0 %v253, 17
      %v257 = vpop.permute.xlu0 %256
      %260 = vrot.lane.b32.xlu0 %v252, 17
      %v261 = vpop.permute.xlu0 %260
      %vm262 = vcmask 138240
      %v263 = vsel %vm262, %v261, %v257
      %v266 = vsel %vm262, %v257, %v261
      %v267 = vld [vmem:[%s0] sm:$0x3]
      %v269 = vlaneseq
      %v270 = vshrl.u32 %v269, 7
      %v271 = vsub.s32 0, %v270
      %v272 = vrot.slane %v267, %v271
      %v273 = vlaneseq
      %v274 = vshrl.u32 %v273, 7
      %v275 = vsub.s32 1, %v274
      %v276 = vrot.slane %v267, %v275
      %v279 = vmul.f32 %v266, %v272
      %v280 = vmul.f32 %v263, %v276
      %281 = vrot.lane.b32.xlu0 %v253, 16
      %v282 = vpop.permute.xlu0 %281
      %284 = vrot.lane.b32.xlu0 %v252, 16
      %v285 = vpop.permute.xlu0 %284
      %vm286 = vcmask 130048
      %v287 = vsel %vm286, %v285, %v282
      %v290 = vsel %vm286, %v282, %v285
      %s291 = scalar_lea.vmem %s0, 2
      %v292 = vld [vmem:[%s291] sm:$0x3]
      %v294 = vlaneseq
      %v295 = vshrl.u32 %v294, 7
      %v296 = vsub.s32 0, %v295
      %v297 = vrot.slane %v292, %v296
      %v298 = vlaneseq
      %v299 = vshrl.u32 %v298, 7
      %v300 = vsub.s32 1, %v299
      %v301 = vrot.slane %v292, %v300
      %v304 = vmul.f32 %v290, %v297
      %v305 = vmul.f32 %v287, %v301
      %306 = vrot.lane.b32.xlu0 %v253, 15
      %v307 = vpop.permute.xlu0 %306
      %309 = vrot.lane.b32.xlu0 %v252, 15
      %v310 = vpop.permute.xlu0 %309
      %vm311 = vcmask 121856
      %v312 = vsel %vm311, %v310, %v307
      %v315 = vsel %vm311, %v307, %v310
      %s316 = scalar_lea.vmem %s0, 4
      %v317 = vld [vmem:[%s316] sm:$0x3]
      %v319 = vlaneseq
      %v320 = vshrl.u32 %v319, 7
      %v321 = vsub.s32 0, %v320
      %v322 = vrot.slane %v317, %v321
      %v323 = vlaneseq
      %v324 = vshrl.u32 %v323, 7
      %v325 = vsub.s32 1, %v324
      %v326 = vrot.slane %v317, %v325
      %v329 = vmul.f32 %v315, %v322
      %v330 = vmul.f32 %v312, %v326
      %331 = vrot.lane.b32.xlu0 %v253, 1
      %v332 = vpop.permute.xlu0 %331
      %334 = vrot.lane.b32.xlu0 %v252, 1
      %v335 = vpop.permute.xlu0 %334
      %vm336 = vcmask 7168
      %v337 = vsel %vm336, %v335, %v332
      %v340 = vsel %vm336, %v332, %v335
      %s341 = scalar_lea.vmem %s0, 6
      %v342 = vld [vmem:[%s341] sm:$0x3]
      %v344 = vlaneseq
      %v345 = vshrl.u32 %v344, 7
      %v346 = vsub.s32 0, %v345
      %v347 = vrot.slane %v342, %v346
      %v348 = vlaneseq
      %v349 = vshrl.u32 %v348, 7
      %v350 = vsub.s32 1, %v349
      %v351 = vrot.slane %v342, %v350
      %v354 = vmul.f32 %v340, %v347
      %v355 = vmul.f32 %v337, %v351
      %s356 = scalar_lea.vmem %s0, 8
      %v357 = vld [vmem:[%s356] sm:$0x3]
      %v359 = vlaneseq
      %v360 = vshrl.u32 %v359, 7
      %v361 = vsub.s32 0, %v360
      %v362 = vrot.slane %v357, %v361
      %v363 = vlaneseq
      %v364 = vshrl.u32 %v363, 7
      %v365 = vsub.s32 1, %v364
      %v366 = vrot.slane %v357, %v365
      %v369 = vmul.f32 %v252, %v362
      %v370 = vmul.f32 %v253, %v366
      %371 = vrot.lane.b32.xlu0 %v252, 127
      %v372 = vpop.permute.xlu0 %371
      %373 = vrot.lane.b32.xlu0 %v253, 127
      %v374 = vpop.permute.xlu0 %373
      %vm375 = vcmask 1039360
      %v376 = vsel %vm375, %v372, %v374
      %v380 = vsel %vm375, %v374, %v372
      %s381 = scalar_lea.vmem %s0, 10
      %v382 = vld [vmem:[%s381] sm:$0x3]
      %v384 = vlaneseq
      %v385 = vshrl.u32 %v384, 7
      %v386 = vsub.s32 0, %v385
      %v387 = vrot.slane %v382, %v386
      %v388 = vlaneseq
      %v389 = vshrl.u32 %v388, 7
      %v390 = vsub.s32 1, %v389
      %v391 = vrot.slane %v382, %v390
      %v394 = vmul.f32 %v376, %v387
      %v395 = vmul.f32 %v380, %v391
      %396 = vrot.lane.b32.xlu0 %v252, 113
      %v397 = vpop.permute.xlu0 %396
      %398 = vrot.lane.b32.xlu0 %v253, 113
      %v399 = vpop.permute.xlu0 %398
      %vm400 = vcmask 924672
      %v401 = vsel %vm400, %v397, %v399
      %v405 = vsel %vm400, %v399, %v397
      %s406 = scalar_lea.vmem %s0, 12
      %v407 = vld [vmem:[%s406] sm:$0x3]
      %v409 = vlaneseq
      %v410 = vshrl.u32 %v409, 7
      %v411 = vsub.s32 0, %v410
      %v412 = vrot.slane %v407, %v411
      %v413 = vlaneseq
      %v414 = vshrl.u32 %v413, 7
      %v415 = vsub.s32 1, %v414
      %v416 = vrot.slane %v407, %v415
      %v419 = vmul.f32 %v401, %v412
      %v420 = vmul.f32 %v405, %v416
      %421 = vrot.lane.b32.xlu0 %v252, 112
      %v422 = vpop.permute.xlu0 %421
      %423 = vrot.lane.b32.xlu0 %v253, 112
      %v424 = vpop.permute.xlu0 %423
      %vm425 = vcmask 916480
      %v426 = vsel %vm425, %v422, %v424
      %v430 = vsel %vm425, %v424, %v422
      %s431 = scalar_lea.vmem %s0, 14
      %v432 = vld [vmem:[%s431] sm:$0x3]
      %v434 = vlaneseq
      %v435 = vshrl.u32 %v434, 7
      %v436 = vsub.s32 0, %v435
      %v437 = vrot.slane %v432, %v436
      %v438 = vlaneseq
      %v439 = vshrl.u32 %v438, 7
      %v440 = vsub.s32 1, %v439
      %v441 = vrot.slane %v432, %v440
      %v444 = vmul.f32 %v426, %v437
      %v445 = vmul.f32 %v430, %v441
      %446 = vrot.lane.b32.xlu0 %v252, 111
      %v447 = vpop.permute.xlu0 %446
      %448 = vrot.lane.b32.xlu0 %v253, 111
      %v449 = vpop.permute.xlu0 %448
      %vm450 = vcmask 908288
      %v451 = vsel %vm450, %v447, %v449
      %v455 = vsel %vm450, %v449, %v447
      %s456 = scalar_lea.vmem %s0, 16
      %v457 = vld [vmem:[%s456] sm:$0x3]
      %v459 = vlaneseq
      %v460 = vshrl.u32 %v459, 7
      %v461 = vsub.s32 0, %v460
      %v462 = vrot.slane %v457, %v461
      %v463 = vlaneseq
      %v464 = vshrl.u32 %v463, 7
      %v465 = vsub.s32 1, %v464
      %v466 = vrot.slane %v457, %v465
      %v469 = vmul.f32 %v451, %v462
      %v470 = vmul.f32 %v455, %v466
      %v471 = vld [vmem:[%s3] sm:$0xff]
      %473 = vset.pattern.permute.xlu0 0
      %474 = vperm.xlu0 %473, %v471
      %v475 = vpop.permute.xlu0 %474
      %vm477 = vcmask 588800
      %v479 = vsel %vm477, %v254, 0
      %481 = vmatprep.subr.mxu0 0.0
      %482 = vmatpush1.msra.mxu0 0.0
      %483 = vmatprep.subr.mxu0 0.0
      %484 = vmatpush1.msra.mxu0 0.0
      %485 = vmatprep.subr.mxu0 0.0
      %486 = vmatpush1.msra.mxu0 0.0
      %487 = vmatprep.subr.mxu0 0.0
      %488 = vmatpush1.msra.mxu0 0.0
      %489 = vmatprep.subr.mxu0 0.0
      %490 = vmatpush1.msra.mxu0 0.0
      %491 = vmatprep.subr.mxu0 0.0
      %492 = vmatpush1.msra.mxu0 0.0
      %493 = vmatprep.subr.mxu0 0.0
      %494 = vmatpush1.msra.mxu0 0.0
      %495 = vmatprep.subr.mxu0 %v470
      %496 = vmatpush1.msra.mxu0 %v469
      %497 = vmatprep.subr.mxu0 %v445
      %498 = vmatpush1.msra.mxu0 %v444
      %499 = vmatprep.subr.mxu0 %v420
      %500 = vmatpush1.msra.mxu0 %v419
      %501 = vmatprep.subr.mxu0 %v395
      %502 = vmatpush1.msra.mxu0 %v394
      %503 = vmatprep.subr.mxu0 %v370
      %504 = vmatpush1.msra.mxu0 %v369
      %505 = vmatprep.subr.mxu0 %v355
      %506 = vmatpush1.msra.mxu0 %v354
      %507 = vmatprep.subr.mxu0 %v330
      %508 = vmatpush1.msra.mxu0 %v329
      %509 = vmatprep.subr.mxu0 %v305
      %510 = vmatpush1.msra.mxu0 %v304
      %511 = vmatprep.subr.mxu0 %v280
      %512 = vmatpush1.msra.mxu0 %v279
      %513 = vmatprep.subr.mxu0 0.0
      %514 = vmatpush2.msra.mxu0 0.0
      %515 = vmatprep.subr.mxu0 0.0
      %516 = vmatpush2.msra.mxu0 0.0
      %517 = vmatprep.subr.mxu0 0.0
      %518 = vmatpush2.msra.mxu0 0.0
      %519 = vmatprep.subr.mxu0 0.0
      %520 = vmatpush2.msra.mxu0 0.0
      %521 = vmatprep.subr.mxu0 0.0
      %522 = vmatpush2.msra.mxu0 0.0
      %523 = vmatprep.subr.mxu0 0.0
      %524 = vmatpush2.msra.mxu0 0.0
      %525 = vmatprep.subr.mxu0 0.0
      %526 = vmatpush2.msra.mxu0 0.0
      %527 = vmatprep.subr.mxu0 0.0
      %528 = vmatpush2.msra.mxu0 0.0
      %529 = vmatprep.subr.mxu0 0.0
      %530 = vmatpush2.msra.mxu0 0.0
      %531 = vmatprep.subr.mxu0 0.0
      %532 = vmatpush2.msra.mxu0 0.0
      %533 = vmatprep.subr.mxu0 0.0
      %534 = vmatpush2.msra.mxu0 0.0
      %535 = vmatprep.subr.mxu0 0.0
      %536 = vmatpush2.msra.mxu0 0.0
      %537 = vmatprep.subr.mxu0 0.0
      %538 = vmatpush2.msra.mxu0 0.0
      %539 = vmatprep.subr.mxu0 0.0
      %540 = vmatpush2.msra.mxu0 0.0
      %541 = vmatprep.subr.mxu0 0.0
      %542 = vmatpush2.msra.mxu0 0.0
      %543 = vmatprep.subr.mxu0 0.0
      %544 = vmatpush2.msra.mxu0 0.0
      %545 = vmatprep.mubr.f32.mxu0 0.0
      %546 = vmatmul.mubr.f32.gmra.mxu0 %v479
      %v547 = vpop.f32.mrf.mxu0
      %v548 = vadd.f32 %v475, %v547
      %v549 = vpop.f32.mrf.mxu0
      %v550 = vadd.f32 %v475, %v549
      %551 = vdwg.mxu0
      %v552 = vmax.f32 %v548, 0.0
      %v553 = vmax.f32 %v550, 0.0
      %v554 = vld [vmem:[%s4] sm:$0xff]
      %556 = vrot.lane.b32.xlu0 %v553, 17
      %v557 = vpop.permute.xlu0 %556
      %560 = vrot.lane.b32.xlu0 %v552, 17
      %v561 = vpop.permute.xlu0 %560
      %v562 = vsel %vm262, %v561, %v557
      %v565 = vsel %vm262, %v557, %v561
      %v566 = vmul.f32 %v565, %v272
      %v567 = vmul.f32 %v562, %v276
      %568 = vrot.lane.b32.xlu0 %v553, 16
      %v569 = vpop.permute.xlu0 %568
      %571 = vrot.lane.b32.xlu0 %v552, 16
      %v572 = vpop.permute.xlu0 %571
      %v573 = vsel %vm286, %v572, %v569
      %v576 = vsel %vm286, %v569, %v572
      %v577 = vmul.f32 %v576, %v297
      %v578 = vmul.f32 %v573, %v301
      %579 = vrot.lane.b32.xlu0 %v553, 15
      %v580 = vpop.permute.xlu0 %579
      %582 = vrot.lane.b32.xlu0 %v552, 15
      %v583 = vpop.permute.xlu0 %582
      %v584 = vsel %vm311, %v583, %v580
      %v587 = vsel %vm311, %v580, %v583
      %v588 = vmul.f32 %v587, %v322
      %v589 = vmul.f32 %v584, %v326
      %590 = vrot.lane.b32.xlu0 %v553, 1
      %v591 = vpop.permute.xlu0 %590
      %593 = vrot.lane.b32.xlu0 %v552, 1
      %v594 = vpop.permute.xlu0 %593
      %v595 = vsel %vm336, %v594, %v591
      %v598 = vsel %vm336, %v591, %v594
      %v599 = vmul.f32 %v598, %v347
      %v600 = vmul.f32 %v595, %v351
      %v601 = vmul.f32 %v552, %v362
      %v602 = vmul.f32 %v553, %v366
      %603 = vrot.lane.b32.xlu0 %v552, 127
      %v604 = vpop.permute.xlu0 %603
      %605 = vrot.lane.b32.xlu0 %v553, 127
      %v606 = vpop.permute.xlu0 %605
      %v607 = vsel %vm375, %v604, %v606
      %v611 = vsel %vm375, %v606, %v604
      %v612 = vmul.f32 %v607, %v387
      %v613 = vmul.f32 %v611, %v391
      %614 = vrot.lane.b32.xlu0 %v552, 113
      %v615 = vpop.permute.xlu0 %614
      %616 = vrot.lane.b32.xlu0 %v553, 113
      %v617 = vpop.permute.xlu0 %616
      %v618 = vsel %vm400, %v615, %v617
      %v622 = vsel %vm400, %v617, %v615
      %v623 = vmul.f32 %v618, %v412
      %v624 = vmul.f32 %v622, %v416
      %625 = vrot.lane.b32.xlu0 %v552, 112
      %v626 = vpop.permute.xlu0 %625
      %627 = vrot.lane.b32.xlu0 %v553, 112
      %v628 = vpop.permute.xlu0 %627
      %v629 = vsel %vm425, %v626, %v628
      %v633 = vsel %vm425, %v628, %v626
      %v634 = vmul.f32 %v629, %v437
      %v635 = vmul.f32 %v633, %v441
      %636 = vrot.lane.b32.xlu0 %v552, 111
      %v637 = vpop.permute.xlu0 %636
      %638 = vrot.lane.b32.xlu0 %v553, 111
      %v639 = vpop.permute.xlu0 %638
      %v640 = vsel %vm450, %v637, %v639
      %v644 = vsel %vm450, %v639, %v637
      %v645 = vmul.f32 %v640, %v462
      %v646 = vmul.f32 %v644, %v466
      %v647 = vld [vmem:[%s5] sm:$0xff]
      %649 = vset.pattern.permute.xlu0 0
      %650 = vperm.xlu0 %649, %v647
      %v651 = vpop.permute.xlu0 %650
      %v654 = vsel %vm477, %v554, 0
      %656 = vmatprep.subr.mxu0 0.0
      %657 = vmatpush1.msra.mxu0 0.0
      %658 = vmatprep.subr.mxu0 0.0
      %659 = vmatpush1.msra.mxu0 0.0
      %660 = vmatprep.subr.mxu0 0.0
      %661 = vmatpush1.msra.mxu0 0.0
      %662 = vmatprep.subr.mxu0 0.0
      %663 = vmatpush1.msra.mxu0 0.0
      %664 = vmatprep.subr.mxu0 0.0
      %665 = vmatpush1.msra.mxu0 0.0
      %666 = vmatprep.subr.mxu0 0.0
      %667 = vmatpush1.msra.mxu0 0.0
      %668 = vmatprep.subr.mxu0 0.0
      %669 = vmatpush1.msra.mxu0 0.0
      %670 = vmatprep.subr.mxu0 %v646
      %671 = vmatpush1.msra.mxu0 %v645
      %672 = vmatprep.subr.mxu0 %v635
      %673 = vmatpush1.msra.mxu0 %v634
      %674 = vmatprep.subr.mxu0 %v624
      %675 = vmatpush1.msra.mxu0 %v623
      %676 = vmatprep.subr.mxu0 %v613
      %677 = vmatpush1.msra.mxu0 %v612
      %678 = vmatprep.subr.mxu0 %v602
      %679 = vmatpush1.msra.mxu0 %v601
      %680 = vmatprep.subr.mxu0 %v600
      %681 = vmatpush1.msra.mxu0 %v599
      %682 = vmatprep.subr.mxu0 %v589
      %683 = vmatpush1.msra.mxu0 %v588
      %684 = vmatprep.subr.mxu0 %v578
      %685 = vmatpush1.msra.mxu0 %v577
      %686 = vmatprep.subr.mxu0 %v567
      %687 = vmatpush1.msra.mxu0 %v566
      %688 = vmatprep.subr.mxu0 0.0
      %689 = vmatpush2.msra.mxu0 0.0
      %690 = vmatprep.subr.mxu0 0.0
      %691 = vmatpush2.msra.mxu0 0.0
      %692 = vmatprep.subr.mxu0 0.0
      %693 = vmatpush2.msra.mxu0 0.0
      %694 = vmatprep.subr.mxu0 0.0
      %695 = vmatpush2.msra.mxu0 0.0
      %696 = vmatprep.subr.mxu0 0.0
      %697 = vmatpush2.msra.mxu0 0.0
      %698 = vmatprep.subr.mxu0 0.0
      %699 = vmatpush2.msra.mxu0 0.0
      %700 = vmatprep.subr.mxu0 0.0
      %701 = vmatpush2.msra.mxu0 0.0
      %702 = vmatprep.subr.mxu0 0.0
      %703 = vmatpush2.msra.mxu0 0.0
      %704 = vmatprep.subr.mxu0 0.0
      %705 = vmatpush2.msra.mxu0 0.0
      %706 = vmatprep.subr.mxu0 0.0
      %707 = vmatpush2.msra.mxu0 0.0
      %708 = vmatprep.subr.mxu0 0.0
      %709 = vmatpush2.msra.mxu0 0.0
      %710 = vmatprep.subr.mxu0 0.0
      %711 = vmatpush2.msra.mxu0 0.0
      %712 = vmatprep.subr.mxu0 0.0
      %713 = vmatpush2.msra.mxu0 0.0
      %714 = vmatprep.subr.mxu0 0.0
      %715 = vmatpush2.msra.mxu0 0.0
      %716 = vmatprep.subr.mxu0 0.0
      %717 = vmatpush2.msra.mxu0 0.0
      %718 = vmatprep.subr.mxu0 0.0
      %719 = vmatpush2.msra.mxu0 0.0
      %720 = vmatprep.mubr.f32.mxu0 0.0
      %721 = vmatmul.mubr.f32.gmra.mxu0 %v654
      %v722 = vpop.f32.mrf.mxu0
      %v723 = vadd.f32 %v651, %v722
      %v724 = vpop.f32.mrf.mxu0
      %v725 = vadd.f32 %v651, %v724
      %726 = vdwg.mxu0
      %v727 = vmax.f32 %v723, 0.0
      %v728 = vmax.f32 %v725, 0.0
      %729 = vst [vmem:[%s251] sm:$0xff] %v727
      %730 = vst [vmem:[%s251 + $0x8] sm:$0xff] %v728
      %p731 = scmp.lt.s32.totalorder %s17, 1
      %s732 = scalar_select %p731, %s17, 1
      %s733 = smul.addr %s732, 2
      %s734 = smul.addr %s733, 8
      %s735 = scalar_lea.vmem %s6, %s734
      // Predicated region
      $region45: #{convx2_forward.1} parent=43 // pred_check
        %p736 = pneg %p166
      $region46: #{convx2_forward.1} parent=43 // pred_check_branch
        %738 = sbr.rel (%p736) target = $region48
      $region47: #{convx2_forward.1} parent=43 // pred_region
        _
      $region48: #{convx2_forward.1} parent=43 // pred_fallthru
        _
    $region44: #{convx2_forward.1} parent=5 // pred_fallthru
      _
    %p739 = scmp.le.s32.totalorder 2, %s12
    // Predicated region
    $region49: #{convx2_forward.1} parent=5 // pred_check
      %p740 = pneg %p739
    $region50: #{convx2_forward.1} parent=5 // pred_check_branch
      %742 = sbr.rel (%p740) target = $region52
    $region51: #{convx2_forward.1} parent=5 // pred_region
      %s743 = ssub.s32 %s12, 2
      // Predicated region
      $region53: #{convx2_forward.1} parent=51 // pred_check
        %p744 = pneg %p172
      $region54: #{convx2_forward.1} parent=51 // pred_check_branch
        %746 = sbr.rel (%p744) target = $region56
      $region55: #{convx2_forward.1} parent=51 // pred_region
        %p747 = scmp.lt.s32.totalorder %s18, 1
        %s748 = scalar_select %p747, %s18, 1
        %s749 = smul.addr %s748, 2
        %s750 = smul.addr %s749, 8
        %s751 = scalar_lea.vmem %s6, %s750
      $region56: #{convx2_forward.1} parent=51 // pred_fallthru
        _
    $region52: #{convx2_forward.1} parent=5 // pred_fallthru
      _
  $region6: #{convx2_forward.1} parent=0 // loop_footer
    %s16 = sadd.s32 1, %s12
  $region7: #{convx2_forward.1} parent=0 // loop_footer_branch
    %11 = sbr.rel target = $region3
  $region8: #{convx2_forward.1} parent=0 // loop_exit
    _

</llo_original>
